<compile_context>
chip_gen: v6e
topology: v6e:2x2x1
jax: 0.10.0
libtpu: 0.0.40
codegen_flags: <defaults>
</compile_context>

<pallas_src>
import math
import functools

import jax
import jax.numpy as jnp
from jax.experimental import pallas as pl
from jax.experimental.pallas import tpu as pltpu


# ---------------------------------------------------------------------------
# Buffer construction — mirrors the PyTorch module's __init__.
# ---------------------------------------------------------------------------
def make_positional_encoding(d_model, max_len=5000, dtype=jnp.float32):
    position = jnp.arange(max_len, dtype=jnp.float32)[:, None]              # (max_len, 1)
    div_term = jnp.exp(
        jnp.arange(0, d_model, 2, dtype=jnp.float32) * (-math.log(10000.0) / d_model)
    )                                                                        # (d_model//2,)
    pe = jnp.zeros((max_len, d_model), dtype=jnp.float32)
    pe = pe.at[:, 0::2].set(jnp.sin(position * div_term))
    pe = pe.at[:, 1::2].set(jnp.cos(position * div_term))
    # pe.unsqueeze(0).transpose(0, 1) -> (max_len, 1, d_model)
    return pe[:, None, :].astype(dtype)


# ---------------------------------------------------------------------------
# Kernel helpers
# ---------------------------------------------------------------------------
def _broadcast_pe(pe_blk, batch):
    # pe_blk: (tile_rows, d) -> (tile_rows, batch*d): one copy of pe per batch slab
    # (matches the row-major flatten of x from (rows, batch, d) to (rows, batch*d)).
    if batch == 1:
        return pe_blk
    return jnp.tile(pe_blk, (1, batch))


def _mix32(z):
    # lowbias32-style uint32 mixer (pure VPU ops; portable, no TPU-only PRNG).
    z = (z ^ (z >> 16)) * jnp.uint32(0x7FEB352D)
    z = (z ^ (z >> 15)) * jnp.uint32(0x846CA68B)
    return z ^ (z >> 16)


# ---------------------------------------------------------------------------
# Kernels
# ---------------------------------------------------------------------------
def _pe_add_kernel(x_ref, pe_ref, o_ref, *, batch):
    pe_wide = _broadcast_pe(pe_ref[...], batch)
    o_ref[...] = (x_ref[...] + pe_wide).astype(o_ref.dtype)


def _pe_add_dropout_kernel(seed_ref, x_ref, pe_ref, o_ref, *, batch,
                           keep_threshold, scale):
    tile_rows, lanes = x_ref.shape
    pe_wide = _broadcast_pe(pe_ref[...], batch)
    y = x_ref[...] + pe_wide

    # Stateless counter-based RNG over global element indices.
    row0 = (pl.program_id(0) * tile_rows).astype(jnp.uint32)
    rows = jax.lax.broadcasted_iota(jnp.int32, (tile_rows, lanes), 0).astype(jnp.uint32)
    cols = jax.lax.broadcasted_iota(jnp.int32, (tile_rows, lanes), 1).astype(jnp.uint32)
    idx = (row0 + rows) * jnp.uint32(lanes) + cols
    seed = seed_ref[0].astype(jnp.uint32)
    bits = _mix32(_mix32(idx) ^ (seed * jnp.uint32(0x9E3779B9)))

    # Integer threshold compare: drop with probability p (bits < p * 2^32).
    keep = bits >= jnp.uint32(keep_threshold)
    o_ref[...] = jnp.where(keep, y * scale, jnp.zeros_like(y)).astype(o_ref.dtype)


# ---------------------------------------------------------------------------
# Wrapper
# ---------------------------------------------------------------------------
def _pick_tile_rows(n_rows, row_bytes, budget_bytes=2 * 1024 * 1024):
    # Full array fits the budget -> single full-extent block (legal per (8,128) rule).
    if n_rows * row_bytes <= budget_bytes:
        return int(n_rows)
    t = (budget_bytes // max(row_bytes, 1)) // 8 * 8
    t = max(8, int(t))
    return int(min(t, n_rows))


def positional_encoding_forward(x, pe, *, p=0.1, train=False, seed=0):
    """x: [seq_len, batch, d_model] -> [seq_len, batch, d_model]."""
    seq, batch, d = x.shape
    lanes = batch * d

    # Free contiguous reshape to a lane-dense 2-D slab; pe cast to x.dtype.
    x2 = x.reshape(seq, lanes)
    pe2 = pe[:seq, 0, :].astype(x.dtype)                     # (seq, d)

    row_bytes = lanes * x.dtype.itemsize
    tile_rows = _pick_tile_rows(seq, row_bytes)
    grid = (pl.cdiv(seq, tile_rows),)

    out_shape = jax.ShapeDtypeStruct((seq, lanes), x.dtype)
    cp = pltpu.CompilerParams(dimension_semantics=("parallel",))

    if (not train) or p <= 0.0:
        out2 = pl.pallas_call(
            functools.partial(_pe_add_kernel, batch=batch),
            out_shape=out_shape,
            grid_spec=pltpu.PrefetchScalarGridSpec(
                num_scalar_prefetch=0,
                grid=grid,
                in_specs=[
                    pl.BlockSpec((tile_rows, lanes), lambda i: (i, 0)),
                    pl.BlockSpec((tile_rows, d), lambda i: (i, 0)),
                ],
                out_specs=pl.BlockSpec((tile_rows, lanes), lambda i: (i, 0)),
            ),
            compiler_params=cp,
        )(x2, pe2)
        return out2.reshape(seq, batch, d)

    keep_threshold = min(int(round(p * 4294967296.0)), 4294967295)
    scale = 1.0 / (1.0 - p)
    seed_arr = jnp.asarray([seed], dtype=jnp.int32)

    out2 = pl.pallas_call(
        functools.partial(_pe_add_dropout_kernel, batch=batch,
                          keep_threshold=keep_threshold, scale=scale),
        out_shape=out_shape,
        grid_spec=pltpu.PrefetchScalarGridSpec(
            num_scalar_prefetch=1,                            # seed -> SMEM
            grid=grid,
            in_specs=[
                pl.BlockSpec((tile_rows, lanes), lambda i, seed_ref: (i, 0)),
                pl.BlockSpec((tile_rows, d), lambda i, seed_ref: (i, 0)),
            ],
            out_specs=pl.BlockSpec((tile_rows, lanes), lambda i, seed_ref: (i, 0)),
        ),
        compiler_params=cp,
    )(seed_arr, x2, pe2)
    return out2.reshape(seq, batch, d)


# ---------------------------------------------------------------------------
# Demo
# ---------------------------------------------------------------------------
if __name__ == "__main__":
    d_model = 32
    seq_len = 8
    batch = 2
    p = 0.1

    key = jax.random.PRNGKey(0)
    x = jax.random.normal(key, (seq_len, batch, d_model), dtype=jnp.float32)
    pe = make_positional_encoding(d_model, max_len=5000)

    # Eval mode (dropout == identity).
    out = positional_encoding_forward(x, pe, p=p, train=False)
    out = jax.block_until_ready(out)
    ref = x + pe[:seq_len].astype(x.dtype)
    assert out.shape == (seq_len, batch, d_model)
    assert jnp.allclose(out, ref, atol=1e-6, rtol=1e-6)

    # Training mode: every element is either dropped (0) or scaled by 1/(1-p).
    out_train = positional_encoding_forward(x, pe, p=p, train=True, seed=123)
    out_train = jax.block_until_ready(out_train)
    assert out_train.shape == (seq_len, batch, d_model)
    scaled = ref / (1.0 - p)
    ok = jnp.isclose(out_train, 0.0, atol=1e-6) | jnp.isclose(out_train, scaled, atol=1e-4)
    assert bool(jnp.all(ok))

    print("KERNEL_OK")
</pallas_src>

<mosaic_0001>
module attributes {stable_mosaic.version = 11 : i64} {
  func.func @_pe_add_kernel(%arg0: i32, %arg1: memref<8x64xf32, #tpu.memory_space<vmem>>, %arg2: memref<8x32xf32, #tpu.memory_space<vmem>>, %arg3: memref<8x64xf32, #tpu.memory_space<vmem>>) attributes {dimension_semantics = [#tpu.dimension_semantics<parallel>], iteration_bounds = array<i64: 1>, scalar_prefetch = 0 : i64, scratch_operands = 0 : i64, tpu.core_type = #tpu.core_type<tc>, window_params = [{transform_indices = @transform_0, window_bounds = array<i64: 8, 64>}, {transform_indices = @transform_1, window_bounds = array<i64: 8, 32>}, {transform_indices = @transform_2, window_bounds = array<i64: 8, 64>}]} {
    %c0 = arith.constant 0 : index
    %c0_0 = arith.constant 0 : index
    %0 = vector.load %arg2[%c0, %c0_0] : memref<8x32xf32, #tpu.memory_space<vmem>>, vector<8x32xf32>
    %1 = tpu.concatenate %0, %0 in 1 : vector<8x32xf32>, vector<8x32xf32> -> vector<8x64xf32>
    %c0_1 = arith.constant 0 : index
    %c0_2 = arith.constant 0 : index
    %2 = vector.load %arg1[%c0_1, %c0_2] : memref<8x64xf32, #tpu.memory_space<vmem>>, vector<8x64xf32>
    %3 = arith.addf %2, %1 : vector<8x64xf32>
    %c0_3 = arith.constant 0 : index
    %c0_4 = arith.constant 0 : index
    %4 = vector.load %arg3[%c0_3, %c0_4] : memref<8x64xf32, #tpu.memory_space<vmem>>, vector<8x64xf32>
    tpu.vector_store %arg3[%c0_3, %c0_4], %3 {strides = array<i32>} : memref<8x64xf32, #tpu.memory_space<vmem>>, vector<8x64xf32>,
    return
  }
  func.func @transform_0(%arg0: i32) -> (i32, i32) {
    %c0_i32 = arith.constant 0 : i32
    %c0_i32_0 = arith.constant 0 : i32
    return %arg0, %c0_i32 : i32, i32
  }
  func.func @transform_1(%arg0: i32) -> (i32, i32) {
    %c0_i32 = arith.constant 0 : i32
    %c0_i32_0 = arith.constant 0 : i32
    return %arg0, %c0_i32 : i32, i32
  }
  func.func @transform_2(%arg0: i32) -> (i32, i32) {
    %c0_i32 = arith.constant 0 : i32
    %c0_i32_0 = arith.constant 0 : i32
    return %arg0, %c0_i32 : i32, i32
  }
}

</mosaic_0001>

<llo_original>
// kernel: tpu_custom_call.1
$region0: #{tpu_custom_call.1}
  #allocation0 [shape = 'u32[]', space=smem, size = 0x4, offset = 0x4, fixed_abs, tag = 'smem constant byte address 0x4 - core index']
  #allocation1 [shape = 'u32[144,128]{1,0:T(1,128)}', space=vmem, size = 0x12000, scoped, tag = 'internal scratch']
  %s0 = inlined_call_operand.hbm [shape: f32[8,64], index: 0, kind: input, shape index: {}]
  %s1 = inlined_call_operand.hbm [shape: f32[8,32], index: 1, kind: input, shape index: {}]
  %s2 = inlined_call_operand.hbm [shape: f32[8,64], index: 2, kind: output, shape index: {}]
  %s3 = sld [smem:[#allocation0]]
  $region26: #{tpu_custom_call.1} parent=0
    _
  %s5 = ssub.s32 1, %s3
  %s6 = scalar_select 0, %s5, %s3
  $region1: #{tpu_custom_call.1} parent=0
    #allocation2 [shape = 'u8[4096]{0}', space=vmem, size = 0x1000, scoped, tag = 'input window, operand 0, single buffered']
    #allocation3 [shape = 's32[1]{0}', space=sflag, size = 0x4, scoped, tag = 'scoped memory for tpu_custom_call.1']
    #allocation4 [shape = 's32[1]{0}', space=sflag, size = 0x4, scoped, tag = 'scoped memory for tpu_custom_call.1']
    #allocation5 [shape = 'u8[4096]{0}', space=vmem, size = 0x1000, scoped, tag = 'input window, operand 1, single buffered']
    #allocation6 [shape = 's32[1]{0}', space=sflag, size = 0x4, scoped, tag = 'scoped memory for tpu_custom_call.1']
    #allocation7 [shape = 'u8[4096]{0}', space=vmem, size = 0x1000, scoped, tag = 'output window, operand 0, single buffered']
    %7 = vsyncpa [#allocation3], 0
    %8 = vsyncpa [#allocation6], 0
    %9 = vsyncpa [#allocation4], 0
    // Predicated region
    $region2: #{tpu_custom_call.1} parent=1 // pred_check
      _
    $region3: #{tpu_custom_call.1} parent=1 // pred_check_branch
      %11 = sbr.rel (0) target = $region5
    $region4: #{tpu_custom_call.1} parent=1 // pred_region
      %s13 = ssub.s32 128, 128
      %14 = vsyncadd [#allocation3], %s13
      %s16 = sshll.u32 [#allocation2], 4
      %s17 = int_to_ptr.vmem [resolvable:$true] %s16
      %19 = dma.hbm_to_vmem [thread:$0]  %s0, 128, %s17, [#allocation3]
    $region5: #{tpu_custom_call.1} parent=1 // pred_fallthru
      _
    // Predicated region
    $region6: #{tpu_custom_call.1} parent=1 // pred_check
      _
    $region7: #{tpu_custom_call.1} parent=1 // pred_check_branch
      %21 = sbr.rel (0) target = $region9
    $region8: #{tpu_custom_call.1} parent=1 // pred_region
      %s23 = ssub.s32 128, 128
      %24 = vsyncadd [#allocation6], %s23
      %s26 = sshll.u32 [#allocation5], 4
      %s27 = int_to_ptr.vmem [resolvable:$true] %s26
      %29 = dma.hbm_to_vmem [thread:$0]  %s1, 128, %s27, [#allocation6]
    $region9: #{tpu_custom_call.1} parent=1 // pred_fallthru
      _
    // Predicated region
    $region10: #{tpu_custom_call.1} parent=1 // pred_check
      _
    $region11: #{tpu_custom_call.1} parent=1 // pred_check_branch
      %31 = sbr.rel (0) target = $region13
    $region12: #{tpu_custom_call.1} parent=1 // pred_region
      %32 = dma.done [#allocation3], 128
    $region13: #{tpu_custom_call.1} parent=1 // pred_fallthru
      _
    // Predicated region
    $region14: #{tpu_custom_call.1} parent=1 // pred_check
      _
    $region15: #{tpu_custom_call.1} parent=1 // pred_check_branch
      %34 = sbr.rel (0) target = $region17
    $region16: #{tpu_custom_call.1} parent=1 // pred_region
      %35 = dma.done [#allocation6], 128
    $region17: #{tpu_custom_call.1} parent=1 // pred_fallthru
      _
    %v36 = vld [vmem:[#allocation5] sm:$0xff]
    %38 = vrot.lane.b32.xlu0 %v36, 32
    %v39 = vpop.permute.xlu0 %38
    %vm41 = vcmask 261120
    %v42 = vsel %vm41, %v36, %v39
    %v43 = vld [vmem:[#allocation2] sm:$0xff]
    %v44 = vadd.f32 %v43, %v42
    %vm45 = vcmask 523264
    %46 = vst.msk [vmem:[#allocation7] sm:$0xff] %vm45, %v44
    // Predicated region
    $region18: #{tpu_custom_call.1} parent=1 // pred_check
      _
    $region19: #{tpu_custom_call.1} parent=1 // pred_check_branch
      %48 = sbr.rel (0) target = $region21
    $region20: #{tpu_custom_call.1} parent=1 // pred_region
      %s50 = ssub.s32 128, 128
      %51 = vsyncadd [#allocation4], %s50
      %s53 = sshll.u32 [#allocation7], 4
      %s54 = int_to_ptr.vmem [resolvable:$true] %s53
      %56 = dma.vmem_to_hbm [thread:$0]  %s54, 128, %s2, [#allocation4]
    $region21: #{tpu_custom_call.1} parent=1 // pred_fallthru
      _
    // Predicated region
    $region22: #{tpu_custom_call.1} parent=1 // pred_check
      _
    $region23: #{tpu_custom_call.1} parent=1 // pred_check_branch
      %58 = sbr.rel (0) target = $region25
    $region24: #{tpu_custom_call.1} parent=1 // pred_region
      %59 = dma.done [#allocation4], 128
    $region25: #{tpu_custom_call.1} parent=1 // pred_fallthru
      _
    %60 = vsyncpa [#allocation3], 1
    %61 = vsyncpa [#allocation6], 1
    %62 = vsyncpa [#allocation4], 1

</llo_original>
